<compile_context>
chip_gen: v6e
topology: v6e:2x2x1
jax: 0.10.0
libtpu: 0.0.40
codegen_flags: <defaults>
</compile_context>

<pallas_src>
import functools

import jax
import jax.numpy as jnp
from jax.experimental import pallas as pl
from jax.experimental.pallas import tpu as pltpu


def _round_up(n: int, m: int) -> int:
    return ((n + m - 1) // m) * m


def highway_kernel(x_ref, w_ref, b_ref, o_ref, *, embed_size):
    # x_ref: (TB, E)   w_ref: (E, NW)   b_ref: (1, NW)   o_ref: (TB, E)
    # Columns [0, E) of w/b hold the proj weights/bias, column E holds the gate
    # weights/bias (bg folded in), remaining columns are zero padding.
    x = x_ref[...]  # native dtype -> full-rate MXU path (bf16 in production)

    # Single fused matmul for (proj | gate), f32 accumulate on the MXU.
    acc = jnp.dot(x, w_ref[...], preferred_element_type=jnp.float32) + b_ref[...]

    proj = jnp.maximum(acc[:, :embed_size], 0.0)                  # (TB, E)
    gate = jax.nn.sigmoid(acc[:, embed_size:embed_size + 1])      # (TB, 1)

    xf = x.astype(jnp.float32)
    # Highway combine: x + g*(proj - x)  ==  g*proj + (1-g)*x
    out = xf + gate * (proj - xf)

    # TODO(synk): training-mode dropout (rate=0.3) not implemented; eval-mode forward only.
    o_ref[...] = out.astype(o_ref.dtype)


def highway_forward(x, wp_t, bp, wg_t, bg, *, block_rows=512):
    """x: (B, E); wp_t: (E, E) = Wp^T; bp: (E,); wg_t: (E, 1) = Wg^T; bg: scalar."""
    B, E = x.shape
    NW = _round_up(E + 1, 128)  # fused (proj | gate) output width, lane-dense
    wdt = x.dtype               # in production pass bf16 weights for full-rate MXU

    # Fuse the gate column into the proj weight matrix; fold bg into the bias row.
    w_cat = (
        jnp.zeros((E, NW), wdt)
        .at[:, :E].set(wp_t.astype(wdt))
        .at[:, E:E + 1].set(wg_t.astype(wdt))
    )
    b_cat = (
        jnp.zeros((1, NW), jnp.float32)
        .at[0, :E].set(bp.astype(jnp.float32))
        .at[0, E].set(jnp.asarray(bg, jnp.float32))
    )

    TB = min(B, block_rows)
    grid = (pl.cdiv(B, TB),)

    kernel = functools.partial(highway_kernel, embed_size=E)
    return pl.pallas_call(
        kernel,
        out_shape=jax.ShapeDtypeStruct((B, E), x.dtype),
        grid=grid,
        in_specs=[
            pl.BlockSpec((TB, E), lambda i: (i, 0)),   # x: streamed per batch tile
            pl.BlockSpec((E, NW), lambda i: (0, 0)),   # fused weights: VMEM-resident
            pl.BlockSpec((1, NW), lambda i: (0, 0)),   # fused bias:    VMEM-resident
        ],
        out_specs=pl.BlockSpec((TB, E), lambda i: (i, 0)),
        compiler_params=pltpu.CompilerParams(
            dimension_semantics=("parallel",),         # batch tiles are independent
        ),
    )(x, w_cat, b_cat)


def highway_ref(x, wp_t, bp, wg_t, bg):
    proj = jnp.maximum(x @ wp_t + bp[None, :], 0.0)
    gate = jax.nn.sigmoid(x @ wg_t + bg)
    return gate * proj + (1.0 - gate) * x


if __name__ == "__main__":
    key = jax.random.PRNGKey(0)
    B, E = 8, 32  # small demo shape; perf wins appear at production batch sizes

    k_x, k_wp, k_bp, k_wg = jax.random.split(key, 4)

    # Deterministic parameter init (mimics nn.Linear uniform init scale).
    bound = 1.0 / jnp.sqrt(E)
    x    = jax.random.normal(k_x, (B, E), jnp.float32)
    wp_t = jax.random.uniform(k_wp, (E, E), jnp.float32, -bound, bound)  # Wp^T
    bp   = jax.random.uniform(k_bp, (E,), jnp.float32, -bound, bound)
    wg_t = jax.random.uniform(k_wg, (E, 1), jnp.float32, -bound, bound)  # Wg^T
    bg   = jnp.float32(-1.0)  # nn.init.constant_(gate bias, -1)

    out = jax.block_until_ready(highway_forward(x, wp_t, bp, wg_t, bg))

    expected = highway_ref(x, wp_t, bp, wg_t, bg)
    assert out.shape == (B, E)
    assert jnp.allclose(out, expected, atol=1e-5, rtol=1e-5)

    print("KERNEL_OK")
</pallas_src>

<mosaic_0001>
module attributes {stable_mosaic.version = 11 : i64} {
  func.func @highway_kernel(%arg0: i32, %arg1: memref<8x32xf32, #tpu.memory_space<vmem>>, %arg2: memref<32x128xf32, #tpu.memory_space<vmem>>, %arg3: memref<1x128xf32, #tpu.memory_space<vmem>>, %arg4: memref<8x32xf32, #tpu.memory_space<vmem>>) attributes {dimension_semantics = [#tpu.dimension_semantics<parallel>], iteration_bounds = array<i64: 1>, scalar_prefetch = 0 : i64, scratch_operands = 0 : i64, tpu.core_type = #tpu.core_type<tc>, window_params = [{transform_indices = @transform_0, window_bounds = array<i64: 8, 32>}, {pipeline_mode = #tpu.pipeline_mode<synchronous>, transform_indices = @transform_1, window_bounds = array<i64: 32, 128>}, {pipeline_mode = #tpu.pipeline_mode<synchronous>, transform_indices = @transform_2, window_bounds = array<i64: 1, 128>}, {transform_indices = @transform_3, window_bounds = array<i64: 8, 32>}]} {
    %c0 = arith.constant 0 : index
    %c0_0 = arith.constant 0 : index
    %0 = vector.load %arg1[%c0, %c0_0] : memref<8x32xf32, #tpu.memory_space<vmem>>, vector<8x32xf32>
    %c0_1 = arith.constant 0 : index
    %c0_2 = arith.constant 0 : index
    %1 = vector.load %arg2[%c0_1, %c0_2] : memref<32x128xf32, #tpu.memory_space<vmem>>, vector<32x128xf32>
    %cst = arith.constant dense<0.000000e+00> : vector<8x128xf32>
    %2 = tpu.matmul %0, %1, %cst {dimension_numbers = #tpu.dot_dimension_numbers<[1], [0], [0], [1], [0, 0, 1, 1], [], []>} : vector<8x32xf32>, vector<32x128xf32>, vector<8x128xf32> -> vector<8x128xf32>
    %c0_3 = arith.constant 0 : index
    %c0_4 = arith.constant 0 : index
    %3 = vector.load %arg3[%c0_3, %c0_4] : memref<1x128xf32, #tpu.memory_space<vmem>>, vector<1x128xf32>
    %4 = vector.broadcast %3 : vector<1x128xf32> to vector<8x128xf32>
    %5 = arith.addf %2, %4 : vector<8x128xf32>
    %6 = vector.extract_strided_slice %5 {offsets = [0, 0], sizes = [8, 32], strides = [1, 1]} : vector<8x128xf32> to vector<8x32xf32>
    %cst_5 = arith.constant 0.000000e+00 : f32
    %7 = vector.broadcast %cst_5 : f32 to vector<8x32xf32>
    %8 = arith.maximumf %6, %7 : vector<8x32xf32>
    %9 = vector.extract_strided_slice %5 {offsets = [0, 32], sizes = [8, 1], strides = [1, 1]} : vector<8x128xf32> to vector<8x1xf32>
    %10 = arith.negf %9 : vector<8x1xf32>
    %11 = math.exp %10 : vector<8x1xf32>
    %cst_6 = arith.constant 1.000000e+00 : f32
    %12 = vector.broadcast %cst_6 : f32 to vector<8x1xf32>
    %13 = arith.addf %12, %11 : vector<8x1xf32>
    %14 = arith.divf %12, %13 : vector<8x1xf32>
    %15 = arith.subf %8, %0 : vector<8x32xf32>
    %16 = vector.broadcast %14 : vector<8x1xf32> to vector<8x32xf32>
    %17 = arith.mulf %16, %15 : vector<8x32xf32>
    %18 = arith.addf %0, %17 : vector<8x32xf32>
    %c0_7 = arith.constant 0 : index
    %c0_8 = arith.constant 0 : index
    %19 = vector.load %arg4[%c0_7, %c0_8] : memref<8x32xf32, #tpu.memory_space<vmem>>, vector<8x32xf32>
    tpu.vector_store %arg4[%c0_7, %c0_8], %18 {strides = array<i32>} : memref<8x32xf32, #tpu.memory_space<vmem>>, vector<8x32xf32>,
    return
  }
  func.func @transform_0(%arg0: i32) -> (i32, i32) {
    %c0_i32 = arith.constant 0 : i32
    %c0_i32_0 = arith.constant 0 : i32
    return %arg0, %c0_i32 : i32, i32
  }
  func.func @transform_1(%arg0: i32) -> (i32, i32) {
    %c0_i32 = arith.constant 0 : i32
    %c0_i32_0 = arith.constant 0 : i32
    %c0_i32_1 = arith.constant 0 : i32
    return %c0_i32, %c0_i32_0 : i32, i32
  }
  func.func @transform_2(%arg0: i32) -> (i32, i32) {
    %c0_i32 = arith.constant 0 : i32
    %c0_i32_0 = arith.constant 0 : i32
    %c0_i32_1 = arith.constant 0 : i32
    return %c0_i32, %c0_i32_0 : i32, i32
  }
  func.func @transform_3(%arg0: i32) -> (i32, i32) {
    %c0_i32 = arith.constant 0 : i32
    %c0_i32_0 = arith.constant 0 : i32
    return %arg0, %c0_i32 : i32, i32
  }
}

</mosaic_0001>

<llo_original>
// kernel: tpu_custom_call.1
$region0: #{tpu_custom_call.1}
  #allocation0 [shape = 'u32[]', space=smem, size = 0x4, offset = 0x4, fixed_abs, tag = 'smem constant byte address 0x4 - core index']
  #allocation1 [shape = 'u32[144,128]{1,0:T(1,128)}', space=vmem, size = 0x12000, scoped, tag = 'internal scratch']
  %s0 = inlined_call_operand.hbm [shape: f32[8,32], index: 0, kind: input, shape index: {}]
  %s1 = inlined_call_operand.hbm [shape: f32[32,128], index: 1, kind: input, shape index: {}]
  %s2 = inlined_call_operand.vmem [shape: f32[1,128], index: 2, kind: input, shape index: {}]
  %s3 = inlined_call_operand.hbm [shape: f32[8,32], index: 3, kind: output, shape index: {}]
  %s4 = sld [smem:[#allocation0]]
  $region30: #{tpu_custom_call.1} parent=0
    _
  %s6 = ssub.s32 1, %s4
  %s7 = scalar_select 0, %s6, %s4
  $region1: #{tpu_custom_call.1} parent=0
    #allocation2 [shape = 'u8[4096]{0}', space=vmem, size = 0x1000, scoped, tag = 'input window, operand 0, single buffered']
    #allocation3 [shape = 's32[1]{0}', space=sflag, size = 0x4, scoped, tag = 'scoped memory for tpu_custom_call.1']
    #allocation4 [shape = 's32[1]{0}', space=sflag, size = 0x4, scoped, tag = 'scoped memory for tpu_custom_call.1']
    #allocation5 [shape = 'u8[16384]{0}', space=vmem, size = 0x4000, scoped, tag = 'input window, operand 1, single buffered']
    #allocation6 [shape = 's32[1]{0}', space=sflag, size = 0x4, scoped, tag = 'scoped memory for tpu_custom_call.1']
    #allocation7 [shape = 'u8[4096]{0}', space=vmem, size = 0x1000, scoped, tag = 'output window, operand 0, single buffered']
    %8 = vsyncpa [#allocation3], 0
    %9 = vsyncpa [#allocation6], 0
    %10 = vsyncpa [#allocation4], 0
    // Predicated region
    $region2: #{tpu_custom_call.1} parent=1 // pred_check
      _
    $region3: #{tpu_custom_call.1} parent=1 // pred_check_branch
      %12 = sbr.rel (0) target = $region5
    $region4: #{tpu_custom_call.1} parent=1 // pred_region
      %s14 = ssub.s32 128, 128
      %15 = vsyncadd [#allocation3], %s14
      %s17 = sshll.u32 [#allocation2], 4
      %s18 = int_to_ptr.vmem [resolvable:$true] %s17
      %20 = dma.hbm_to_vmem [thread:$0]  %s0, 128, %s18, [#allocation3]
    $region5: #{tpu_custom_call.1} parent=1 // pred_fallthru
      _
    // Predicated region
    $region6: #{tpu_custom_call.1} parent=1 // pred_check
      _
    $region7: #{tpu_custom_call.1} parent=1 // pred_check_branch
      %22 = sbr.rel (0) target = $region9
    $region8: #{tpu_custom_call.1} parent=1 // pred_region
      %s24 = ssub.s32 512, 512
      %25 = vsyncadd [#allocation6], %s24
      %s26 = sshll.u32 [#allocation5], 4
      %s27 = int_to_ptr.vmem [resolvable:$true] %s26
      %32 = dma.hbm_to_vmem [thread:$0]  %s1, 512, %s27, [#allocation6], 128, 128, 8
    $region9: #{tpu_custom_call.1} parent=1 // pred_fallthru
      _
    // Predicated region
    $region10: #{tpu_custom_call.1} parent=1 // pred_check
      _
    $region11: #{tpu_custom_call.1} parent=1 // pred_check_branch
      %34 = sbr.rel (0) target = $region13
    $region12: #{tpu_custom_call.1} parent=1 // pred_region
      _
    $region13: #{tpu_custom_call.1} parent=1 // pred_fallthru
      _
    // Predicated region
    $region14: #{tpu_custom_call.1} parent=1 // pred_check
      _
    $region15: #{tpu_custom_call.1} parent=1 // pred_check_branch
      %36 = sbr.rel (0) target = $region17
    $region16: #{tpu_custom_call.1} parent=1 // pred_region
      %37 = dma.done [#allocation3], 128
    $region17: #{tpu_custom_call.1} parent=1 // pred_fallthru
      _
    // Predicated region
    $region18: #{tpu_custom_call.1} parent=1 // pred_check
      _
    $region19: #{tpu_custom_call.1} parent=1 // pred_check_branch
      %39 = sbr.rel (0) target = $region21
    $region20: #{tpu_custom_call.1} parent=1 // pred_region
      %40 = dma.done [#allocation6], 512
    $region21: #{tpu_custom_call.1} parent=1 // pred_fallthru
      _
    %v41 = vld [vmem:[#allocation2] sm:$0xff]
    %v42 = vld [vmem:[#allocation5] sm:$0xff]
    %v43 = vld [vmem:[#allocation5 + $0x8] sm:$0xff]
    %v44 = vld [vmem:[#allocation5 + $0x10] sm:$0xff]
    %v45 = vld [vmem:[#allocation5 + $0x18] sm:$0xff]
    %v46 = vld [vmem:[%s2] sm:$0x1]
    %v48 = vlaneseq
    %v49 = vshrl.u32 %v48, 7
    %v50 = vsub.s32 0, %v49
    %v51 = vrot.slane %v46, %v50
    %vm53 = vcmask 261120
    %v55 = vsel %vm53, %v41, 0
    %57 = vmatprep.subr.mxu0 0.0
    %58 = vmatpush1.msra.mxu0 0.0
    %59 = vmatprep.subr.mxu0 0.0
    %60 = vmatpush1.msra.mxu0 0.0
    %61 = vmatprep.subr.mxu0 0.0
    %62 = vmatpush1.msra.mxu0 0.0
    %63 = vmatprep.subr.mxu0 0.0
    %64 = vmatpush1.msra.mxu0 0.0
    %65 = vmatprep.subr.mxu0 0.0
    %66 = vmatpush1.msra.mxu0 0.0
    %67 = vmatprep.subr.mxu0 0.0
    %68 = vmatpush1.msra.mxu0 0.0
    %69 = vmatprep.subr.mxu0 0.0
    %70 = vmatpush1.msra.mxu0 0.0
    %71 = vmatprep.subr.mxu0 0.0
    %72 = vmatpush1.msra.mxu0 0.0
    %73 = vmatprep.subr.mxu0 0.0
    %74 = vmatpush1.msra.mxu0 0.0
    %75 = vmatprep.subr.mxu0 0.0
    %76 = vmatpush1.msra.mxu0 0.0
    %77 = vmatprep.subr.mxu0 0.0
    %78 = vmatpush1.msra.mxu0 0.0
    %79 = vmatprep.subr.mxu0 0.0
    %80 = vmatpush1.msra.mxu0 0.0
    %81 = vmatprep.subr.mxu0 0.0
    %82 = vmatpush1.msra.mxu0 %v45
    %83 = vmatprep.subr.mxu0 0.0
    %84 = vmatpush1.msra.mxu0 %v44
    %85 = vmatprep.subr.mxu0 0.0
    %86 = vmatpush1.msra.mxu0 %v43
    %87 = vmatprep.subr.mxu0 0.0
    %88 = vmatpush1.msra.mxu0 %v42
    %89 = vmatprep.subr.mxu0 0.0
    %90 = vmatpush2.msra.mxu0 0.0
    %91 = vmatprep.subr.mxu0 0.0
    %92 = vmatpush2.msra.mxu0 0.0
    %93 = vmatprep.subr.mxu0 0.0
    %94 = vmatpush2.msra.mxu0 0.0
    %95 = vmatprep.subr.mxu0 0.0
    %96 = vmatpush2.msra.mxu0 0.0
    %97 = vmatprep.subr.mxu0 0.0
    %98 = vmatpush2.msra.mxu0 0.0
    %99 = vmatprep.subr.mxu0 0.0
    %100 = vmatpush2.msra.mxu0 0.0
    %101 = vmatprep.subr.mxu0 0.0
    %102 = vmatpush2.msra.mxu0 0.0
    %103 = vmatprep.subr.mxu0 0.0
    %104 = vmatpush2.msra.mxu0 0.0
    %105 = vmatprep.subr.mxu0 0.0
    %106 = vmatpush2.msra.mxu0 0.0
    %107 = vmatprep.subr.mxu0 0.0
    %108 = vmatpush2.msra.mxu0 0.0
    %109 = vmatprep.subr.mxu0 0.0
    %110 = vmatpush2.msra.mxu0 0.0
    %111 = vmatprep.subr.mxu0 0.0
    %112 = vmatpush2.msra.mxu0 0.0
    %113 = vmatprep.subr.mxu0 0.0
    %114 = vmatpush2.msra.mxu0 0.0
    %115 = vmatprep.subr.mxu0 0.0
    %116 = vmatpush2.msra.mxu0 0.0
    %117 = vmatprep.subr.mxu0 0.0
    %118 = vmatpush2.msra.mxu0 0.0
    %119 = vmatprep.subr.mxu0 0.0
    %120 = vmatpush2.msra.mxu0 0.0
    %121 = vmatprep.mubr.f32.mxu0 0.0
    %122 = vmatmul.mubr.f32.gmra.mxu0 %v55
    %v123 = vpop.f32.mrf.mxu0
    %v124 = vadd.f32 %v51, %v123
    %v125 = vpop.f32.mrf.mxu0
    %126 = vdwg.mxu0
    %v127 = vmax.f32 %v124, 0.0
    %v128 = vxor.u32 %v124, 2147483648
    %v129 = vmul.f32 %v128, 1.442695
    %v130 = vpow.pop %v129
    %v131 = vadd.f32 %v130, 1.0
    %v132 = vrcp.pop %v131
    %v133 = vmul.f32 1.0, %v132
    %v134 = vsub.f32 %v127, %v41
    %136 = vset.pattern.permute.xlu0 32
    %137 = vperm.xlu0 %136, %v133
    %v138 = vpop.permute.xlu0 %137
    %v140 = vmul.f32 %v138, %v134
    %v141 = vadd.f32 %v41, %v140
    %142 = vst.msk [vmem:[#allocation7] sm:$0xff] %vm53, %v141
    // Predicated region
    $region22: #{tpu_custom_call.1} parent=1 // pred_check
      _
    $region23: #{tpu_custom_call.1} parent=1 // pred_check_branch
      %144 = sbr.rel (0) target = $region25
    $region24: #{tpu_custom_call.1} parent=1 // pred_region
      %s146 = ssub.s32 128, 128
      %147 = vsyncadd [#allocation4], %s146
      %s149 = sshll.u32 [#allocation7], 4
      %s150 = int_to_ptr.vmem [resolvable:$true] %s149
      %152 = dma.vmem_to_hbm [thread:$0]  %s150, 128, %s3, [#allocation4]
    $region25: #{tpu_custom_call.1} parent=1 // pred_fallthru
      _
    // Predicated region
    $region26: #{tpu_custom_call.1} parent=1 // pred_check
      _
    $region27: #{tpu_custom_call.1} parent=1 // pred_check_branch
      %154 = sbr.rel (0) target = $region29
    $region28: #{tpu_custom_call.1} parent=1 // pred_region
      %155 = dma.done [#allocation4], 128
    $region29: #{tpu_custom_call.1} parent=1 // pred_fallthru
      _
    %156 = vsyncpa [#allocation3], 1
    %157 = vsyncpa [#allocation6], 1
    %158 = vsyncpa [#allocation4], 1

</llo_original>
